<compile_context>
chip_gen: v7x
topology: tpu7x:2x2x1
jax: 0.10.0
libtpu: 0.0.40
codegen_flags: <defaults>
</compile_context>

<pallas_src>
import jax
import jax.numpy as jnp
from jax.experimental import pallas as pl
from jax.experimental.pallas import tpu as pltpu


def _actor_head_kernel(x_ref, nb_ref, w_ref, b_ref, out_ref):
    """Block-diagonal MXU dot (== Linear H->1 per doc) + -inf mask + softmax.

    x_ref  : (Bt, D*H)  f32  lane-dense flattened per-doc hidden states
    nb_ref : (Bt, 1)    i32  number of valid docs per observation
    w_ref  : (D*H, D)   f32  block-diagonal weight (col d holds w in rows d*H:(d+1)*H)
    b_ref  : (1,)       f32  linear bias (SMEM)
    out_ref: (Bt, D)    f32  softmax logits (padded doc slots -> 0)
    """
    x2 = x_ref[...]                                   # (Bt, D*H)
    w_bd = w_ref[...]                                 # (D*H, D)
    bias = b_ref[0]                                   # scalar (SMEM)

    # One small MXU dot replaces the per-lane multiply + cross-lane reduce.
    scores = jnp.dot(x2, w_bd, preferred_element_type=jnp.float32) + bias  # (Bt, D)

    # Mask padded doc slots with -inf (matches torch.full(..., -inf) concat).
    doc_idx = jax.lax.broadcasted_iota(jnp.int32, scores.shape, 1)
    valid = doc_idx < nb_ref[...]                     # (Bt,1) broadcast
    masked = jnp.where(valid, scores, -jnp.inf)

    # Softmax over the doc axis (dim=1).
    m = jnp.max(masked, axis=1, keepdims=True)
    e = jnp.exp(masked - m)                           # -inf -> 0 exactly
    denom = jnp.sum(e, axis=1, keepdims=True)
    inv = pl.reciprocal(denom, approx=True)           # EUP vrcp (free slot)
    inv = inv * (2.0 - denom * inv)                   # one Newton step -> ~f32 exact
    out_ref[...] = e * inv


def _vmem_capacity_bytes():
    try:
        return int(pltpu.get_tpu_info().vmem_capacity_bytes)
    except Exception:
        return 64 << 20            # conservative (v7x physical per-TC VMEM)


def _round_up(v, m):
    return -(-v // m) * m


def _choose_b_tile(B, DH):
    """Batch-tile rows: ~1-4 MiB of lane-dense x per block, >=8 blocks when big."""
    row_bytes = DH * 4
    vmem = _vmem_capacity_bytes()
    # ~1/16 of VMEM, clamped to [1 MiB, 4 MiB]: big enough to hit ~85% of the
    # HBM roofline, small enough that the double-buffered *padded* footprint
    # fits every generation's default scoped VMEM (v5e 16 MiB included).
    target = min(max(vmem // 16, 1 << 20), 4 << 20)
    rows = max(8, (target // row_bytes) // 8 * 8)     # multiple of 8 (sublane rule)
    if B >= 64:
        # Keep >= ~8 grid blocks: 2-4 per TensorCore on v7x megacore, plus
        # enough iterations to hide the DMA pipeline ramp.
        cap = max(8, (B // 8) // 8 * 8)
        rows = min(rows, cap)
    if B <= rows:
        return B                                      # single full-batch block
    return rows


def my_actor_head(x_padded, nb_docs, w, b, *, b_tile=None):
    """x_padded: (B, D, H) f32; nb_docs: (B,) i32; w: (H,) f32; b: () f32."""
    B, D, H = x_padded.shape
    DH = D * H

    # Lane-dense flatten (free for a contiguous array).
    x2 = x_padded.reshape(B, DH).astype(jnp.float32)
    nb2 = nb_docs.astype(jnp.int32).reshape(B, 1)
    # Block-diagonal weight: w_bd[d*H + h, d] = w[h].
    w_bd = (jnp.eye(D, dtype=jnp.float32)[:, None, :]
            * w.astype(jnp.float32)[None, :, None]).reshape(DH, D)
    b1 = jnp.reshape(b, (1,)).astype(jnp.float32)

    if b_tile is None:
        b_tile = _choose_b_tile(B, DH)
    n_blocks = pl.cdiv(B, b_tile)     # no jnp.pad of x: partial last block OK

    # Real (lane/sublane padded), double-buffered VMEM footprint.
    bt_pad = _round_up(b_tile, 8)
    x_blk = bt_pad * _round_up(DH, 128) * 4
    nb_blk = bt_pad * 128 * 4                          # (Bt,1) pads to 128 lanes
    out_blk = bt_pad * _round_up(D, 128) * 4
    w_blk = _round_up(DH, 8) * _round_up(D, 128) * 4
    footprint = 2 * (x_blk + nb_blk + out_blk + w_blk)
    vmem_limit = min(max(int(1.5 * footprint) + (2 << 20), 16 << 20), 48 << 20)

    cost = pl.CostEstimate(
        flops=2 * B * D * H + 4 * B * D,
        transcendentals=B * D,
        bytes_accessed=B * DH * 4 + B * D * 4 + B * 4 + DH * D * 4,
    )

    out = pl.pallas_call(
        _actor_head_kernel,
        out_shape=jax.ShapeDtypeStruct((B, D), jnp.float32),
        grid=(n_blocks,),
        in_specs=[
            pl.BlockSpec((b_tile, DH), lambda i: (i, 0)),
            pl.BlockSpec((b_tile, 1), lambda i: (i, 0)),
            pl.BlockSpec((DH, D), lambda i: (0, 0)),
            pl.BlockSpec(memory_space=pltpu.MemorySpace.SMEM),
        ],
        out_specs=pl.BlockSpec((b_tile, D), lambda i: (i, 0)),
        compiler_params=pltpu.CompilerParams(
            dimension_semantics=("parallel",),
            vmem_limit_bytes=vmem_limit,
        ),
        cost_estimate=cost,
    )(x2, nb2, w_bd, b1)

    return out


def my_actor_head_ref(x_padded, nb_docs, w, b):
    """Pure-JAX reference of the same computation (for verification)."""
    scores = jnp.einsum("bdh,h->bd", x_padded, w) + b
    D = x_padded.shape[1]
    doc_idx = jnp.arange(D)[None, :]
    masked = jnp.where(doc_idx < nb_docs[:, None], scores, -jnp.inf)
    return jax.nn.softmax(masked, axis=1)


if __name__ == "__main__":
    # Small shapes consistent with the forward:
    #   batch=2 observations, nb_docs_max=8, middle_dim (gnn hidden) = 32.
    B, D, H = 2, 8, 32
    key = jax.random.PRNGKey(0)
    kx, kw, kb = jax.random.split(key, 3)

    # Synthesized gnnAgent output (padded per-doc hidden states) and doc counts.
    x_padded = jax.random.normal(kx, (B, D, H), dtype=jnp.float32)
    nb_docs = jnp.array([8, 5], dtype=jnp.int32)      # obs 1 has 3 padded slots

    # Deterministic parameters for self.last = Linear(H, 1, bias=True).
    w = jax.random.normal(kw, (H,), dtype=jnp.float32) * 0.1
    b = jax.random.normal(kb, (), dtype=jnp.float32) * 0.1

    logits = my_actor_head(x_padded, nb_docs, w, b)
    logits = jax.block_until_ready(logits)

    ref = my_actor_head_ref(x_padded, nb_docs, w, b)
    assert logits.shape == (B, D)
    assert jnp.allclose(logits, ref, atol=1e-4, rtol=1e-4)
    # Rows sum to 1, padded slots are exactly 0.
    assert jnp.allclose(jnp.sum(logits, axis=1), 1.0, atol=1e-4)
    assert jnp.all(logits[1, 5:] == 0.0)

    # Exercise the multi-block grid and the non-divisible last block
    # (no jnp.pad of x: OOB reads are don't-care, OOB writes are masked).
    B2 = 20
    k2 = jax.random.PRNGKey(1)
    x2p = jax.random.normal(k2, (B2, D, H), dtype=jnp.float32)
    nb2 = (jax.random.randint(jax.random.PRNGKey(2), (B2,), 1, D + 1)
           .astype(jnp.int32))
    out2 = jax.block_until_ready(my_actor_head(x2p, nb2, w, b, b_tile=8))
    ref2 = my_actor_head_ref(x2p, nb2, w, b)
    assert out2.shape == (B2, D)
    assert jnp.allclose(out2, ref2, atol=1e-4, rtol=1e-4)

    print("KERNEL_OK")
</pallas_src>

<mosaic_0001>
module attributes {stable_mosaic.version = 11 : i64} {
  func.func @_actor_head_kernel(%arg0: i32, %arg1: memref<2x256xf32, #tpu.memory_space<vmem>>, %arg2: memref<2x1xi32, #tpu.memory_space<vmem>>, %arg3: memref<256x8xf32, #tpu.memory_space<vmem>>, %arg4: memref<1xf32, #tpu.memory_space<smem>>, %arg5: memref<2x8xf32, #tpu.memory_space<vmem>>) attributes {dimension_semantics = [#tpu.dimension_semantics<parallel>], iteration_bounds = array<i64: 1>, scalar_prefetch = 0 : i64, scratch_operands = 0 : i64, tpu.core_type = #tpu.core_type<tc>, window_params = [{transform_indices = @transform_0, window_bounds = array<i64: 2, 256>}, {transform_indices = @transform_1, window_bounds = array<i64: 2, 1>}, {pipeline_mode = #tpu.pipeline_mode<synchronous>, transform_indices = @transform_2, window_bounds = array<i64: 256, 8>}, {transform_indices = @transform_3, window_bounds = array<i64: 1>}, {transform_indices = @transform_4, window_bounds = array<i64: 2, 8>}]} {
    %c0 = arith.constant 0 : index
    %c0_0 = arith.constant 0 : index
    %0 = vector.load %arg1[%c0, %c0_0] : memref<2x256xf32, #tpu.memory_space<vmem>>, vector<2x256xf32>
    %c0_1 = arith.constant 0 : index
    %c0_2 = arith.constant 0 : index
    %1 = vector.load %arg3[%c0_1, %c0_2] : memref<256x8xf32, #tpu.memory_space<vmem>>, vector<256x8xf32>
    %c0_3 = arith.constant 0 : index
    %2 = memref.load %arg4[%c0_3] : memref<1xf32, #tpu.memory_space<smem>>
    %cst = arith.constant dense<0.000000e+00> : vector<2x8xf32>
    %3 = tpu.matmul %0, %1, %cst {dimension_numbers = #tpu.dot_dimension_numbers<[1], [0], [0], [1], [0, 0, 1, 1], [], []>} : vector<2x256xf32>, vector<256x8xf32>, vector<2x8xf32> -> vector<2x8xf32>
    %4 = vector.broadcast %2 : f32 to vector<2x8xf32>
    %5 = arith.addf %3, %4 : vector<2x8xf32>
    %6 = tpu.iota {dimensions = array<i32: 1>} : vector<2x8xi32>
    %c0_4 = arith.constant 0 : index
    %c0_5 = arith.constant 0 : index
    %7 = vector.load %arg2[%c0_4, %c0_5] : memref<2x1xi32, #tpu.memory_space<vmem>>, vector<2x1xi32>
    %8 = vector.broadcast %7 : vector<2x1xi32> to vector<2x8xi32>
    %9 = arith.cmpi slt, %6, %8 : vector<2x8xi32>
    %cst_6 = arith.constant 0xFF800000 : f32
    %10 = vector.broadcast %cst_6 : f32 to vector<2x8xf32>
    %11 = arith.select %9, %5, %10 : vector<2x8xi1>, vector<2x8xf32>
    %cst_7 = arith.constant dense<0xFF800000> : vector<2xf32>
    %12 = vector.multi_reduction <maximumf>, %11, %cst_7 [1] : vector<2x8xf32> to vector<2xf32>
    %13 = vector.shape_cast %12 : vector<2xf32> to vector<2x1xf32>
    %14 = vector.broadcast %13 : vector<2x1xf32> to vector<2x8xf32>
    %15 = arith.subf %11, %14 : vector<2x8xf32>
    %16 = math.exp %15 : vector<2x8xf32>
    %cst_8 = arith.constant dense<0.000000e+00> : vector<2xf32>
    %17 = vector.multi_reduction <add>, %16, %cst_8 [1] : vector<2x8xf32> to vector<2xf32>
    %18 = vector.shape_cast %17 : vector<2xf32> to vector<2x1xf32>
    %19 = tpu.reciprocal %18 {approx = true} : vector<2x1xf32> -> vector<2x1xf32>
    %20 = arith.mulf %18, %19 : vector<2x1xf32>
    %cst_9 = arith.constant 2.000000e+00 : f32
    %21 = vector.broadcast %cst_9 : f32 to vector<2x1xf32>
    %22 = arith.subf %21, %20 : vector<2x1xf32>
    %23 = arith.mulf %19, %22 : vector<2x1xf32>
    %24 = vector.broadcast %23 : vector<2x1xf32> to vector<2x8xf32>
    %25 = arith.mulf %16, %24 : vector<2x8xf32>
    %c0_10 = arith.constant 0 : index
    %c0_11 = arith.constant 0 : index
    %26 = vector.load %arg5[%c0_10, %c0_11] : memref<2x8xf32, #tpu.memory_space<vmem>>, vector<2x8xf32>
    tpu.vector_store %arg5[%c0_10, %c0_11], %25 {strides = array<i32>} : memref<2x8xf32, #tpu.memory_space<vmem>>, vector<2x8xf32>,
    return
  }
  func.func @transform_0(%arg0: i32) -> (i32, i32) {
    %c0_i32 = arith.constant 0 : i32
    %c0_i32_0 = arith.constant 0 : i32
    return %arg0, %c0_i32 : i32, i32
  }
  func.func @transform_1(%arg0: i32) -> (i32, i32) {
    %c0_i32 = arith.constant 0 : i32
    %c0_i32_0 = arith.constant 0 : i32
    return %arg0, %c0_i32 : i32, i32
  }
  func.func @transform_2(%arg0: i32) -> (i32, i32) {
    %c0_i32 = arith.constant 0 : i32
    %c0_i32_0 = arith.constant 0 : i32
    %c0_i32_1 = arith.constant 0 : i32
    return %c0_i32, %c0_i32_0 : i32, i32
  }
  func.func @transform_3(%arg0: i32) -> i32 {
    %c0_i32 = arith.constant 0 : i32
    %c0_i32_0 = arith.constant 0 : i32
    return %c0_i32 : i32
  }
  func.func @transform_4(%arg0: i32) -> (i32, i32) {
    %c0_i32 = arith.constant 0 : i32
    %c0_i32_0 = arith.constant 0 : i32
    return %arg0, %c0_i32 : i32, i32
  }
}

</mosaic_0001>

<llo_original>
// kernel: tpu_custom_call.1
$region0: #{tpu_custom_call.1}
  #allocation0 [shape = 'u32[]', space=smem, size = 0x4, offset = 0x4, fixed_abs, tag = 'smem constant byte address 0x4 - core index']
  #allocation1 [shape = 'u32[144,128]{1,0:T(1,128)}', space=vmem, size = 0x12000, scoped, tag = 'internal scratch']
  #allocation2 [shape = 'f32[1]{0:T(128)S(6)}', space=smem, size = 0x200, scoped, tag = 'scoped memory for tpu_custom_call.1']
  %s0 = inlined_call_operand.vmem [shape: f32[2,256], index: 0, kind: input, shape index: {}]
  %s1 = inlined_call_operand.vmem [shape: s32[2,1], index: 1, kind: input, shape index: {}]
  %s2 = inlined_call_operand.vmem [shape: f32[256,8], index: 2, kind: input, shape index: {}]
  %s3 = inlined_call_operand.<no memory space> [shape: f32[1], index: 3, kind: input, shape index: {}]
  %s4 = inlined_call_operand.hbm [shape: f32[2,8], index: 4, kind: output, shape index: {}]
  %s5 = sld [smem:[#allocation0]]
  $region26: #{tpu_custom_call.1} parent=0
    _
  %s7 = ssub.s32 1, %s5
  %s8 = scalar_select 0, %s7, %s5
  %9 = sst [smem:[#allocation2]] %s3
  $region1: #{tpu_custom_call.1} parent=0
    #allocation3 [shape = 'u8[1024]{0}', space=vmem, size = 0x400, scoped, tag = 'output window, operand 0, single buffered']
    #allocation4 [shape = 's32[1]{0}', space=sflag, size = 0x4, scoped, tag = 'scoped memory for tpu_custom_call.1']
    %10 = vsyncpa [#allocation4], 0
    // Predicated region
    $region2: #{tpu_custom_call.1} parent=1 // pred_check
      _
    $region3: #{tpu_custom_call.1} parent=1 // pred_check_branch
      %12 = sbr.rel (0) target = $region5
    $region4: #{tpu_custom_call.1} parent=1 // pred_region
      _
    $region5: #{tpu_custom_call.1} parent=1 // pred_fallthru
      _
    // Predicated region
    $region6: #{tpu_custom_call.1} parent=1 // pred_check
      _
    $region7: #{tpu_custom_call.1} parent=1 // pred_check_branch
      %14 = sbr.rel (0) target = $region9
    $region8: #{tpu_custom_call.1} parent=1 // pred_region
      _
    $region9: #{tpu_custom_call.1} parent=1 // pred_fallthru
      _
    // Predicated region
    $region10: #{tpu_custom_call.1} parent=1 // pred_check
      _
    $region11: #{tpu_custom_call.1} parent=1 // pred_check_branch
      %16 = sbr.rel (0) target = $region13
    $region12: #{tpu_custom_call.1} parent=1 // pred_region
      _
    $region13: #{tpu_custom_call.1} parent=1 // pred_fallthru
      _
    // Predicated region
    $region14: #{tpu_custom_call.1} parent=1 // pred_check
      _
    $region15: #{tpu_custom_call.1} parent=1 // pred_check_branch
      %18 = sbr.rel (0) target = $region17
    $region16: #{tpu_custom_call.1} parent=1 // pred_region
      _
    $region17: #{tpu_custom_call.1} parent=1 // pred_fallthru
      _
    %v19 = vld [vmem:[%s0] sm:$0xf]
    %v20 = vld [vmem:[%s2] sm:$0xff]
    %v21 = vld [vmem:[%s2 + $0x8] sm:$0xff]
    %v22 = vld [vmem:[%s2 + $0x10] sm:$0xff]
    %v23 = vld [vmem:[%s2 + $0x18] sm:$0xff]
    %v24 = vld [vmem:[%s2 + $0x20] sm:$0xff]
    %v25 = vld [vmem:[%s2 + $0x28] sm:$0xff]
    %v26 = vld [vmem:[%s2 + $0x30] sm:$0xff]
    %v27 = vld [vmem:[%s2 + $0x38] sm:$0xff]
    %v28 = vld [vmem:[%s2 + $0x40] sm:$0xff]
    %v29 = vld [vmem:[%s2 + $0x48] sm:$0xff]
    %v30 = vld [vmem:[%s2 + $0x50] sm:$0xff]
    %v31 = vld [vmem:[%s2 + $0x58] sm:$0xff]
    %v32 = vld [vmem:[%s2 + $0x60] sm:$0xff]
    %v33 = vld [vmem:[%s2 + $0x68] sm:$0xff]
    %v34 = vld [vmem:[%s2 + $0x70] sm:$0xff]
    %v35 = vld [vmem:[%s2 + $0x78] sm:$0xff]
    %v36 = vld [vmem:[%s2 + $0x80] sm:$0xff]
    %v37 = vld [vmem:[%s2 + $0x88] sm:$0xff]
    %v38 = vld [vmem:[%s2 + $0x90] sm:$0xff]
    %v39 = vld [vmem:[%s2 + $0x98] sm:$0xff]
    %v40 = vld [vmem:[%s2 + $0xa0] sm:$0xff]
    %v41 = vld [vmem:[%s2 + $0xa8] sm:$0xff]
    %v42 = vld [vmem:[%s2 + $0xb0] sm:$0xff]
    %v43 = vld [vmem:[%s2 + $0xb8] sm:$0xff]
    %v44 = vld [vmem:[%s2 + $0xc0] sm:$0xff]
    %v45 = vld [vmem:[%s2 + $0xc8] sm:$0xff]
    %v46 = vld [vmem:[%s2 + $0xd0] sm:$0xff]
    %v47 = vld [vmem:[%s2 + $0xd8] sm:$0xff]
    %v48 = vld [vmem:[%s2 + $0xe0] sm:$0xff]
    %v49 = vld [vmem:[%s2 + $0xe8] sm:$0xff]
    %v50 = vld [vmem:[%s2 + $0xf0] sm:$0xff]
    %v51 = vld [vmem:[%s2 + $0xf8] sm:$0xff]
    %s52 = sld [smem:[#allocation2]]
    %v53 = vstv %s52
    %v56 = vunpack.c.l.s4 1983009808
    %v57 = vunpack.c.0.s8 %v56
    %v58 = vlaneseq
    %v59 = vshrl.u32 %v58, 7
    %v60 = vsub.s32 %v57, %v59
    %v61 = vrot.slane %v19, %v60
    %v62 = vcombine.high %v61, %v61
    %65 = vmatprep.subr.mxu0 0.0
    %66 = vmatpush1.msra.mxu0 %v20
    %67 = vmatprep.subr.mxu0 0.0
    %68 = vmatpush1.msra.mxu0 %v21
    %69 = vmatprep.subr.mxu0 0.0
    %70 = vmatpush1.msra.mxu0 %v22
    %71 = vmatprep.subr.mxu0 0.0
    %72 = vmatpush1.msra.mxu0 %v23
    %73 = vmatprep.subr.mxu0 0.0
    %74 = vmatpush1.msra.mxu0 %v24
    %75 = vmatprep.subr.mxu0 0.0
    %76 = vmatpush1.msra.mxu0 %v25
    %77 = vmatprep.subr.mxu0 0.0
    %78 = vmatpush1.msra.mxu0 %v26
    %79 = vmatprep.subr.mxu0 0.0
    %80 = vmatpush1.msra.mxu0 %v27
    %81 = vmatprep.subr.mxu0 0.0
    %82 = vmatpush1.msra.mxu0 %v28
    %83 = vmatprep.subr.mxu0 0.0
    %84 = vmatpush1.msra.mxu0 %v29
    %85 = vmatprep.subr.mxu0 0.0
    %86 = vmatpush1.msra.mxu0 %v30
    %87 = vmatprep.subr.mxu0 0.0
    %88 = vmatpush1.msra.mxu0 %v31
    %89 = vmatprep.subr.mxu0 0.0
    %90 = vmatpush1.msra.mxu0 %v32
    %91 = vmatprep.subr.mxu0 0.0
    %92 = vmatpush1.msra.mxu0 %v33
    %93 = vmatprep.subr.mxu0 0.0
    %94 = vmatpush1.msra.mxu0 %v34
    %95 = vmatprep.subr.mxu0 0.0
    %96 = vmatpush1.msra.mxu0 %v35
    %97 = vmatprep.subr.mxu0 0.0
    %98 = vmatpush1.msra.mxu0 %v36
    %99 = vmatprep.subr.mxu0 0.0
    %100 = vmatpush1.msra.mxu0 %v37
    %101 = vmatprep.subr.mxu0 0.0
    %102 = vmatpush1.msra.mxu0 %v38
    %103 = vmatprep.subr.mxu0 0.0
    %104 = vmatpush1.msra.mxu0 %v39
    %105 = vmatprep.subr.mxu0 0.0
    %106 = vmatpush1.msra.mxu0 %v40
    %107 = vmatprep.subr.mxu0 0.0
    %108 = vmatpush1.msra.mxu0 %v41
    %109 = vmatprep.subr.mxu0 0.0
    %110 = vmatpush1.msra.mxu0 %v42
    %111 = vmatprep.subr.mxu0 0.0
    %112 = vmatpush1.msra.mxu0 %v43
    %113 = vmatprep.subr.mxu0 0.0
    %114 = vmatpush1.msra.mxu0 %v44
    %115 = vmatprep.subr.mxu0 0.0
    %116 = vmatpush1.msra.mxu0 %v45
    %117 = vmatprep.subr.mxu0 0.0
    %118 = vmatpush1.msra.mxu0 %v46
    %119 = vmatprep.subr.mxu0 0.0
    %120 = vmatpush1.msra.mxu0 %v47
    %121 = vmatprep.subr.mxu0 0.0
    %122 = vmatpush1.msra.mxu0 %v48
    %123 = vmatprep.subr.mxu0 0.0
    %124 = vmatpush1.msra.mxu0 %v49
    %125 = vmatprep.subr.mxu0 0.0
    %126 = vmatpush1.msra.mxu0 %v50
    %127 = vmatprep.subr.mxu0 0.0
    %128 = vmatpush1.msra.mxu0 %v51
    %129 = vmatprep.mubr.f32.mxu0 %v62
    %130 = vmatmul.mubr.f32.gmra.mrb[0].mxu0 %v61
    %v131 = vpop.f32.mrb[0].mxu0
    %v132 = vadd.f32 %v53, %v131
    %v133 = vpop.f32.mrb[0].mxu0
    %134 = vdwg.mxu0
    %v135 = vlaneseq
    %v136 = vand.u32 %v135, 127
    %v137 = vld [vmem:[%s1] sm:$0x3]
    %138 = vset.pattern.permute.xlu0 0
    %139 = vperm.xlu0 %138, %v137
    %v140 = vpop.permute.xlu0 %139
    %vm141 = vcmp.lt.s32.totalorder %v136, %v140
    %v142 = vsel %vm141, %v132, -inf
    %vm143 = vcmask 58368
    %v144 = vsel %vm143, %v142, -inf
    %145 = vmax.xlane.f32.xlu0 %v144
    %v146 = vpop.xlane.xlu0 %145
    %v147 = vsub.f32 %v142, %v146
    %v148 = vmul.f32 %v147, 1.442695
    %v149 = vpow.pop %v148
    %v150 = vsel %vm143, %v149, 0.0
    %151 = vadd.xlane.f32.xlu0 %v150
    %v152 = vpop.xlane.xlu0 %151
    %v153 = vrcp.pop %v152
    %v154 = vmul.f32 %v152, %v153
    %v155 = vsub.f32 2.0, %v154
    %v156 = vmul.f32 %v153, %v155
    %v157 = vmul.f32 %v149, %v156
    %158 = vst.msk [vmem:[#allocation3] sm:$0x3] %vm143, %v157
    // Predicated region
    $region18: #{tpu_custom_call.1} parent=1 // pred_check
      _
    $region19: #{tpu_custom_call.1} parent=1 // pred_check_branch
      %160 = sbr.rel (0) target = $region21
    $region20: #{tpu_custom_call.1} parent=1 // pred_region
      %s162 = ssub.s32 32, 32
      %163 = vsyncadd [#allocation4], %s162
      %s165 = sshll.u32 [#allocation3], 4
      %s166 = int_to_ptr.vmem [resolvable:$true] %s165
      %168 = dma.vmem_to_hbm [thread:$0]  %s166, 32, %s4, [#allocation4]
    $region21: #{tpu_custom_call.1} parent=1 // pred_fallthru
      _
    // Predicated region
    $region22: #{tpu_custom_call.1} parent=1 // pred_check
      _
    $region23: #{tpu_custom_call.1} parent=1 // pred_check_branch
      %170 = sbr.rel (0) target = $region25
    $region24: #{tpu_custom_call.1} parent=1 // pred_region
      %171 = dma.done [#allocation4], 32
    $region25: #{tpu_custom_call.1} parent=1 // pred_fallthru
      _
    %172 = vsyncpa [#allocation4], 1

</llo_original>
